<compile_context>
chip_gen: v6e
topology: v6e:2x2x1
jax: 0.10.0
libtpu: 0.0.40
codegen_flags: <defaults>
</compile_context>

<pallas_src>
import functools

import jax
import jax.numpy as jnp
from jax.experimental import pallas as pl
from jax.experimental.pallas import tpu as pltpu


def _weighted_ce_kernel(logits_ref, aux_ref, out_ref, *, n_rows):
    """One batch tile: masked, weighted CE partial sum -> one (8, 128) out tile."""
    i = pl.program_id(0)

    logits = logits_ref[...].astype(jnp.float32)              # [TN, C]
    tn, c = logits.shape

    aux = aux_ref[...]                                        # [TN, 2] f32
    tgt = aux[:, 0:1].astype(jnp.int32)                       # [TN, 1] target index
    w = aux[:, 1:2]                                           # [TN, 1] per-sample weight

    # target membership mask from a lane iota (no gather / MXU needed)
    col = jax.lax.broadcasted_iota(jnp.int32, (tn, c), 1)     # [TN, C]
    is_tgt = col == tgt                                       # [TN, C]

    # numerically stable cross entropy: logsumexp(logits) - logits[target]
    m = jnp.max(logits, axis=-1, keepdims=True)               # [TN, 1]
    lse = m + jnp.log(jnp.sum(jnp.exp(logits - m), axis=-1, keepdims=True))
    tgt_logit = jnp.sum(jnp.where(is_tgt, logits, 0.0), axis=-1, keepdims=True)
    ce = lse - tgt_logit                                      # [TN, 1]

    # mask rows past the real batch: the ragged last block reads unspecified
    # data; jnp.where also drops any NaN/inf those garbage rows may produce.
    row = jax.lax.broadcasted_iota(jnp.int32, (tn, 1), 0)     # [TN, 1]
    valid = (i * tn + row) < n_rows
    contrib = jnp.where(valid, ce * w, 0.0)                   # [TN, 1]

    partial = jnp.sum(contrib)                                # scalar partial sum
    out_ref[...] = jnp.full(out_ref.shape, partial, dtype=out_ref.dtype)


def _pick_block_n(n, c):
    """Batch-tile rows: ~2 MiB of f32 logits per buffer, multiple of 16, and
    capped at ceil(N/2) so the parallel grid has >= 2 steps (v7x megacore)."""
    per_row_bytes = max(4 * c, 1)
    bn = (2 * 1024 * 1024) // per_row_bytes
    bn = max(16, min(1024, bn))
    bn = (bn // 16) * 16
    half = (((n + 1) // 2) + 15) // 16 * 16
    return max(16, min(bn, half))


@functools.partial(jax.jit, static_argnames=("block_n",))
def weighted_ce_loss(logits, targets, weight_matrix, *, block_n=None):
    n, c = logits.shape
    if block_n is None:
        block_n = _pick_block_n(n, c)
    assert block_n % 8 == 0 and block_n >= 8
    num_tiles = pl.cdiv(n, block_n)

    # Hoisted once: per-class weight = row-max of the [C, C] weight matrix.
    row_max = jnp.max(weight_matrix.astype(jnp.float32), axis=1)         # [C]
    # Per-sample weight gather in the wrapper (tiny O(N)); pack target index and
    # weight into a single (N, 2) f32 side-band stream for the kernel.
    w = row_max[targets]                                                 # [N]
    aux = jnp.stack([targets.astype(jnp.float32), w], axis=1)            # [N, 2]

    bytes_accessed = (
        n * c * logits.dtype.itemsize + n * 2 * 4 + num_tiles * 8 * 128 * 4
    )
    cost = pl.CostEstimate(
        flops=6 * n * c, transcendentals=n * c + n, bytes_accessed=bytes_accessed
    )

    partials = pl.pallas_call(
        functools.partial(_weighted_ce_kernel, n_rows=n),
        out_shape=jax.ShapeDtypeStruct((num_tiles, 8, 128), jnp.float32),
        grid=(num_tiles,),
        in_specs=[
            pl.BlockSpec((block_n, c), lambda i: (i, 0)),
            pl.BlockSpec((block_n, 2), lambda i: (i, 0)),
        ],
        out_specs=pl.BlockSpec((1, 8, 128), lambda i: (i, 0, 0)),
        compiler_params=pltpu.CompilerParams(
            dimension_semantics=("parallel",),
            vmem_limit_bytes=48 * 1024 * 1024,
        ),
        cost_estimate=cost,
    )(logits, aux)

    # mean over the real (un-padded) batch — wrapper glue
    return jnp.sum(partials[:, 0, 0]) / n


def _reference(logits, targets, weight_matrix):
    logp = jax.nn.log_softmax(logits.astype(jnp.float32), axis=-1)
    ce = -jnp.take_along_axis(logp, targets[:, None], axis=-1)[:, 0]
    w = jnp.max(weight_matrix[targets], axis=1)
    return jnp.mean(ce * w)


if __name__ == "__main__":
    key = jax.random.PRNGKey(0)
    k1, k2, k3 = jax.random.split(key, 3)

    N, C = 70, 128  # non-multiple-of-block batch to exercise the ragged last tile
    logits = jax.random.normal(k1, (N, C), dtype=jnp.float32)
    targets = jax.random.randint(k2, (N,), 0, C, dtype=jnp.int32)
    weight_matrix = jax.random.uniform(k3, (C, C), dtype=jnp.float32)

    ref = _reference(logits, targets, weight_matrix)

    # default path: auto block_n=48 -> 2 grid steps, ragged last tile masked in-kernel
    out = jax.block_until_ready(weighted_ce_loss(logits, targets, weight_matrix))
    assert jnp.allclose(out, ref, rtol=1e-5, atol=1e-5), (out, ref)

    # explicit multi-block path (5 grid steps, ragged last tile)
    out2 = jax.block_until_ready(
        weighted_ce_loss(logits, targets, weight_matrix, block_n=16))
    assert jnp.allclose(out2, ref, rtol=1e-5, atol=1e-5), (out2, ref)

    # bf16 logits stay bf16 in HBM (halves the dominant stream); kernel upcasts
    logits_bf16 = logits.astype(jnp.bfloat16)
    ref_bf16 = _reference(logits_bf16.astype(jnp.float32), targets, weight_matrix)
    out3 = jax.block_until_ready(
        weighted_ce_loss(logits_bf16, targets, weight_matrix))
    assert jnp.allclose(out3, ref_bf16, rtol=1e-3, atol=1e-3), (out3, ref_bf16)

    print("KERNEL_OK")
</pallas_src>

<mosaic_0001>
module attributes {stable_mosaic.version = 11 : i64} {
  func.func @_weighted_ce_kernel(%arg0: i32, %arg1: memref<48x128xf32, #tpu.memory_space<vmem>>, %arg2: memref<48x2xf32, #tpu.memory_space<vmem>>, %arg3: memref<1x8x128xf32, #tpu.memory_space<vmem>>) attributes {dimension_semantics = [#tpu.dimension_semantics<parallel>], iteration_bounds = array<i64: 2>, scalar_prefetch = 0 : i64, scratch_operands = 0 : i64, tpu.core_type = #tpu.core_type<tc>, window_params = [{transform_indices = @transform_0, window_bounds = array<i64: 48, 128>}, {transform_indices = @transform_1, window_bounds = array<i64: 48, 2>}, {transform_indices = @transform_2, window_bounds = array<i64: 1, 8, 128>}]} {
    %c0 = arith.constant 0 : index
    %c0_0 = arith.constant 0 : index
    %0 = vector.load %arg1[%c0, %c0_0] : memref<48x128xf32, #tpu.memory_space<vmem>>, vector<48x128xf32>
    %c0_1 = arith.constant 0 : index
    %c0_2 = arith.constant 0 : index
    %1 = vector.load %arg2[%c0_1, %c0_2] : memref<48x2xf32, #tpu.memory_space<vmem>>, vector<48x2xf32>
    %2 = vector.extract_strided_slice %1 {offsets = [0, 0], sizes = [48, 1], strides = [1, 1]} : vector<48x2xf32> to vector<48x1xf32>
    %3 = arith.fptosi %2 : vector<48x1xf32> to vector<48x1xi32>
    %4 = vector.extract_strided_slice %1 {offsets = [0, 1], sizes = [48, 1], strides = [1, 1]} : vector<48x2xf32> to vector<48x1xf32>
    %5 = tpu.iota {dimensions = array<i32: 1>} : vector<48x128xi32>
    %6 = vector.broadcast %3 : vector<48x1xi32> to vector<48x128xi32>
    %7 = arith.cmpi eq, %5, %6 : vector<48x128xi32>
    %cst = arith.constant dense<0xFF800000> : vector<48xf32>
    %8 = vector.multi_reduction <maximumf>, %0, %cst [1] : vector<48x128xf32> to vector<48xf32>
    %9 = vector.shape_cast %8 : vector<48xf32> to vector<48x1xf32>
    %10 = vector.broadcast %9 : vector<48x1xf32> to vector<48x128xf32>
    %11 = arith.subf %0, %10 : vector<48x128xf32>
    %12 = math.exp %11 : vector<48x128xf32>
    %cst_3 = arith.constant dense<0.000000e+00> : vector<48xf32>
    %13 = vector.multi_reduction <add>, %12, %cst_3 [1] : vector<48x128xf32> to vector<48xf32>
    %14 = vector.shape_cast %13 : vector<48xf32> to vector<48x1xf32>
    %15 = math.log %14 : vector<48x1xf32>
    %16 = arith.addf %9, %15 : vector<48x1xf32>
    %cst_4 = arith.constant 0.000000e+00 : f32
    %17 = vector.broadcast %cst_4 : f32 to vector<48x128xf32>
    %18 = arith.select %7, %0, %17 : vector<48x128xi1>, vector<48x128xf32>
    %cst_5 = arith.constant dense<0.000000e+00> : vector<48xf32>
    %19 = vector.multi_reduction <add>, %18, %cst_5 [1] : vector<48x128xf32> to vector<48xf32>
    %20 = vector.shape_cast %19 : vector<48xf32> to vector<48x1xf32>
    %21 = arith.subf %16, %20 : vector<48x1xf32>
    %22 = tpu.iota {dimensions = array<i32: 0>} : vector<48x1xi32>
    %c48_i32 = arith.constant 48 : i32
    %23 = arith.muli %arg0, %c48_i32 : i32
    %24 = vector.broadcast %23 : i32 to vector<48x1xi32>
    %25 = arith.addi %24, %22 : vector<48x1xi32>
    %c70_i32 = arith.constant 70 : i32
    %26 = vector.broadcast %c70_i32 : i32 to vector<48x1xi32>
    %27 = arith.cmpi slt, %25, %26 : vector<48x1xi32>
    %28 = arith.mulf %21, %4 : vector<48x1xf32>
    %cst_6 = arith.constant 0.000000e+00 : f32
    %29 = vector.broadcast %cst_6 : f32 to vector<48x1xf32>
    %30 = arith.select %27, %28, %29 : vector<48x1xi1>, vector<48x1xf32>
    %31 = vector.shape_cast %30 : vector<48x1xf32> to vector<1x48x1xf32>
    %cst_7 = arith.constant dense<0.000000e+00> : vector<1xf32>
    %32 = vector.multi_reduction <add>, %31, %cst_7 [1, 2] : vector<1x48x1xf32> to vector<1xf32>
    %33 = vector.shape_cast %32 : vector<1xf32> to vector<1x1x1xf32>
    %34 = vector.extract %33[0, 0, 0] : f32 from vector<1x1x1xf32>
    %35 = vector.broadcast %34 : f32 to vector<1x8x128xf32>
    %c0_8 = arith.constant 0 : index
    %c0_9 = arith.constant 0 : index
    %c0_10 = arith.constant 0 : index
    %36 = vector.load %arg3[%c0_8, %c0_9, %c0_10] : memref<1x8x128xf32, #tpu.memory_space<vmem>>, vector<1x8x128xf32>
    tpu.vector_store %arg3[%c0_8, %c0_9, %c0_10], %35 {strides = array<i32>} : memref<1x8x128xf32, #tpu.memory_space<vmem>>, vector<1x8x128xf32>,
    return
  }
  func.func @transform_0(%arg0: i32) -> (i32, i32) {
    %c0_i32 = arith.constant 0 : i32
    %c0_i32_0 = arith.constant 0 : i32
    return %arg0, %c0_i32 : i32, i32
  }
  func.func @transform_1(%arg0: i32) -> (i32, i32) {
    %c0_i32 = arith.constant 0 : i32
    %c0_i32_0 = arith.constant 0 : i32
    return %arg0, %c0_i32 : i32, i32
  }
  func.func @transform_2(%arg0: i32) -> (i32, i32, i32) {
    %c0_i32 = arith.constant 0 : i32
    %c0_i32_0 = arith.constant 0 : i32
    %c0_i32_1 = arith.constant 0 : i32
    return %arg0, %c0_i32, %c0_i32_0 : i32, i32, i32
  }
}

</mosaic_0001>

<llo_original>
// kernel: weighted_ce_loss.1
$region0: #{weighted_ce_loss.1}
  #allocation0 [shape = 'u32[]', space=smem, size = 0x4, offset = 0x4, fixed_abs, tag = 'smem constant byte address 0x4 - core index']
  #allocation1 [shape = 'u32[144,128]{1,0:T(1,128)}', space=vmem, size = 0x12000, scoped, tag = 'internal scratch']
  %s0 = inlined_call_operand.vmem [shape: f32[70,128], index: 0, kind: input, shape index: {}]
  %s1 = inlined_call_operand.vmem [shape: f32[70,2], index: 1, kind: input, shape index: {}]
  %s2 = inlined_call_operand.vmem [shape: f32[2,8,128], index: 2, kind: output, shape index: {}]
  %s3 = sld [smem:[#allocation0]]
  $region41: #{weighted_ce_loss.1} parent=0
    _
  %s5 = ssub.s32 1, %s3
  %s6 = scalar_select 0, %s5, %s3
  loop: start=0, step=1, limit=4
  $region2: #{weighted_ce_loss.1} parent=0 // loop_pre_header
    _
  $region3: #{weighted_ce_loss.1} parent=0 // loop_header
    %s8 = sphi 0, %s12
    %p9 = scmp.ge.s32.totalorder %s8, 4
    %s18 = sphi 0, %s20
    %s21 = sphi 0, %s18
    %s22 = sphi 0, %s21
    %s38 = sphi 0, %s22
    %s44 = sphi 0, %s46
    %s47 = sphi 0, %s44
    %s48 = sphi 0, %s47
    %s64 = sphi 0, %s48
    %s70 = sphi 0, %s72
    %s73 = sphi 0, %s70
    %s74 = sphi 0, %s73
    %s90 = sphi 0, %s74
  $region4: #{weighted_ce_loss.1} parent=0 // loop_header_branch
    %11 = sbr.rel (%p9) target = $region8
  $region5: #{weighted_ce_loss.1} parent=0 // loop_body
    %s13 = ssub.s32 %s8, 1
    %s14 = ssub.s32 %s8, 2
    %s15 = sadd.s32 %s8, 1
    %s16 = ssub.s32 %s8, %s15
    %p17 = scmp.eq.s32.totalorder %s16, 0
    %s19 = sadd.s32 %s18, 1
    %s20 = scalar_select %p17, %s18, %s19
    %p23 = pneg %p17
    %p24 = scmp.eq.s32.totalorder %s8, 1
    %p25 = por %p23, %p24
    %p26 = scmp.ne.s32.totalorder %s18, %s21
    %p27 = scmp.eq.s32.totalorder %s8, 0
    %p28 = por %p26, %p27
    %p29 = scmp.ne.s32.totalorder %s18, %s21
    %p30 = scmp.eq.s32.totalorder %s13, 1
    %p31 = por %p29, %p30
    %p32 = scmp.ne.s32.totalorder %s21, %s22
    %p33 = scmp.eq.s32.totalorder %s13, 0
    %p34 = por %p32, %p33
    %p35 = scmp.ne.s32.totalorder %s21, %s22
    %p36 = scmp.eq.s32.totalorder %s14, 1
    %p37 = por %p35, %p36
    %p39 = scmp.ne.s32.totalorder %s22, %s38
    %p40 = scmp.eq.s32.totalorder %s14, 0
    %p41 = por %p39, %p40
    %s42 = ssub.s32 %s8, %s15
    %p43 = scmp.eq.s32.totalorder %s42, 0
    %s45 = sadd.s32 %s44, 1
    %s46 = scalar_select %p43, %s44, %s45
    %p49 = pneg %p43
    %p50 = scmp.eq.s32.totalorder %s8, 1
    %p51 = por %p49, %p50
    %p52 = scmp.ne.s32.totalorder %s44, %s47
    %p53 = scmp.eq.s32.totalorder %s8, 0
    %p54 = por %p52, %p53
    %p55 = scmp.ne.s32.totalorder %s44, %s47
    %p56 = scmp.eq.s32.totalorder %s13, 1
    %p57 = por %p55, %p56
    %p58 = scmp.ne.s32.totalorder %s47, %s48
    %p59 = scmp.eq.s32.totalorder %s13, 0
    %p60 = por %p58, %p59
    %p61 = scmp.ne.s32.totalorder %s47, %s48
    %p62 = scmp.eq.s32.totalorder %s14, 1
    %p63 = por %p61, %p62
    %p65 = scmp.ne.s32.totalorder %s48, %s64
    %p66 = scmp.eq.s32.totalorder %s14, 0
    %p67 = por %p65, %p66
    %s68 = ssub.s32 %s8, %s15
    %p69 = scmp.eq.s32.totalorder %s68, 0
    %s71 = sadd.s32 %s70, 1
    %s72 = scalar_select %p69, %s70, %s71
    %p75 = pneg %p69
    %p76 = scmp.eq.s32.totalorder %s8, 1
    %p77 = por %p75, %p76
    %p78 = scmp.ne.s32.totalorder %s70, %s73
    %p79 = scmp.eq.s32.totalorder %s8, 0
    %p80 = por %p78, %p79
    %p81 = scmp.ne.s32.totalorder %s70, %s73
    %p82 = scmp.eq.s32.totalorder %s13, 1
    %p83 = por %p81, %p82
    %p84 = scmp.ne.s32.totalorder %s73, %s74
    %p85 = scmp.eq.s32.totalorder %s13, 0
    %p86 = por %p84, %p85
    %p87 = scmp.ne.s32.totalorder %s73, %s74
    %p88 = scmp.eq.s32.totalorder %s14, 1
    %p89 = por %p87, %p88
    %p91 = scmp.ne.s32.totalorder %s74, %s90
    %p92 = scmp.eq.s32.totalorder %s14, 0
    %p93 = por %p91, %p92
    %p94 = scmp.le.s32.totalorder 1, %s8
    %p95 = scmp.lt.s32.totalorder %s8, 3
    %p96 = pnand %p94, %p95
    %p97 = pneg %p96
    // Predicated region
    $region9: #{weighted_ce_loss.1} parent=5 // pred_check
      _
    $region10: #{weighted_ce_loss.1} parent=5 // pred_check_branch
      %99 = sbr.rel (%p96) target = $region12
    $region11: #{weighted_ce_loss.1} parent=5 // pred_region
      %s100 = ssub.s32 %s8, 1
    $region12: #{weighted_ce_loss.1} parent=5 // pred_fallthru
      _
    %p101 = scmp.lt.s32.totalorder %s8, 2
    // Predicated region
    $region13: #{weighted_ce_loss.1} parent=5 // pred_check
      %p102 = pneg %p101
    $region14: #{weighted_ce_loss.1} parent=5 // pred_check_branch
      %104 = sbr.rel (%p102) target = $region16
    $region15: #{weighted_ce_loss.1} parent=5 // pred_region
      // Predicated region
      $region17: #{weighted_ce_loss.1} parent=15 // pred_check
        %p105 = pneg %p28
      $region18: #{weighted_ce_loss.1} parent=15 // pred_check_branch
        %107 = sbr.rel (%p105) target = $region20
      $region19: #{weighted_ce_loss.1} parent=15 // pred_region
        %s108 = smul.u32 6, %s8
        %s109 = ssub.s32 9, %s108
        %p110 = scmp.lt.s32.totalorder %s109, 6
        %s111 = scalar_select %p110, %s109, 6
        %s112 = smul.u32 128, %s111
        %p113 = scmp.lt.s32.totalorder %s108, 8
        %s114 = scalar_select %p113, %s108, 8
        %s115 = smul.addr %s114, 8
        %s116 = scalar_lea.vmem %s0, %s115
        %s117 = smul.u32 6, %s8
        %s118 = ssub.s32 9, %s117
        %p119 = scmp.lt.s32.totalorder %s118, 6
        %s120 = scalar_select %p119, %s118, 6
        %s121 = smul.u32 128, %s120
      $region20: #{weighted_ce_loss.1} parent=15 // pred_fallthru
        _
      // Predicated region
      $region21: #{weighted_ce_loss.1} parent=15 // pred_check
        %p122 = pneg %p54
      $region22: #{weighted_ce_loss.1} parent=15 // pred_check_branch
        %124 = sbr.rel (%p122) target = $region24
      $region23: #{weighted_ce_loss.1} parent=15 // pred_region
        %s125 = smul.u32 6, %s8
        %s126 = ssub.s32 9, %s125
        %p127 = scmp.lt.s32.totalorder %s126, 6
        %s128 = scalar_select %p127, %s126, 6
        %s129 = smul.u32 128, %s128
        %p130 = scmp.lt.s32.totalorder %s125, 8
        %s131 = scalar_select %p130, %s125, 8
        %s132 = smul.addr %s131, 8
        %s133 = scalar_lea.vmem %s1, %s132
        %s134 = smul.u32 6, %s8
        %s135 = ssub.s32 9, %s134
        %p136 = scmp.lt.s32.totalorder %s135, 6
        %s137 = scalar_select %p136, %s135, 6
        %s138 = smul.u32 128, %s137
      $region24: #{weighted_ce_loss.1} parent=15 // pred_fallthru
        _
    $region16: #{weighted_ce_loss.1} parent=5 // pred_fallthru
      _
    %p139 = scmp.le.s32.totalorder 1, %s8
    %p140 = scmp.lt.s32.totalorder %s8, 3
    %p141 = pnand %p139, %p140
    %p142 = pneg %p141
    // Predicated region
    $region25: #{weighted_ce_loss.1} parent=5 // pred_check
      _
    $region26: #{weighted_ce_loss.1} parent=5 // pred_check_branch
      %144 = sbr.rel (%p141) target = $region28
    $region27: #{weighted_ce_loss.1} parent=5 // pred_region
      %s145 = ssub.s32 %s8, 1
      %s146 = smul.u32 6, %s13
      %s147 = ssub.s32 9, %s146
      %p148 = scmp.lt.s32.totalorder %s147, 6
      %s149 = scalar_select %p148, %s147, 6
      %s150 = smul.u32 128, %s149
      %p151 = scmp.lt.s32.totalorder %s146, 8
      %s152 = scalar_select %p151, %s146, 8
      %s153 = smul.addr %s152, 8
      %s154 = scalar_lea.vmem %s0, %s153
      %p155 = pneg %p34
      %p156 = pneg %p31
      %s157 = smul.u32 6, %s13
      %s158 = ssub.s32 9, %s157
      %p159 = scmp.lt.s32.totalorder %s158, 6
      %s160 = scalar_select %p159, %s158, 6
      %s161 = smul.u32 128, %s160
      %p162 = scmp.lt.s32.totalorder %s157, 8
      %s163 = scalar_select %p162, %s157, 8
      %s164 = smul.addr %s163, 8
      %s165 = scalar_lea.vmem %s1, %s164
      %p166 = pneg %p60
      %p167 = pneg %p57
      %p168 = pneg %p86
      %p169 = pneg %p83
      %p170 = scmp.lt.s32.totalorder %s13, 1
      %s171 = scalar_select %p170, %s13, 1
      %s172 = smul.addr %s171, 8
      %s173 = scalar_lea.vmem %s2, %s172
      %s174 = smul.u32 6, %s13
      %s175 = ssub.s32 9, %s174
      %p176 = scmp.lt.s32.totalorder %s175, 6
      %s177 = scalar_select %p176, %s175, 6
      %s178 = smul.u32 128, %s177
      %p179 = scmp.lt.s32.totalorder %s174, 8
      %s180 = scalar_select %p179, %s174, 8
      %s181 = smul.addr %s180, 8
      %s182 = scalar_lea.vmem %s0, %s181
      %s183 = smul.u32 6, %s13
      %s184 = ssub.s32 9, %s183
      %p185 = scmp.lt.s32.totalorder %s184, 6
      %s186 = scalar_select %p185, %s184, 6
      %s187 = smul.u32 128, %s186
      %s188 = smul.u32 6, %s13
      %s189 = ssub.s32 9, %s188
      %p190 = scmp.lt.s32.totalorder %s189, 6
      %s191 = scalar_select %p190, %s189, 6
      %s192 = smul.u32 128, %s191
      %p193 = scmp.lt.s32.totalorder %s188, 8
      %s194 = scalar_select %p193, %s188, 8
      %s195 = smul.addr %s194, 8
      %s196 = scalar_lea.vmem %s1, %s195
      %s197 = smul.u32 6, %s13
      %s198 = ssub.s32 9, %s197
      %p199 = scmp.lt.s32.totalorder %s198, 6
      %s200 = scalar_select %p199, %s198, 6
      %s201 = smul.u32 128, %s200
      %p202 = scmp.lt.s32.totalorder %s13, 1
      %s203 = scalar_select %p202, %s13, 1
      %s204 = smul.addr %s203, 8
      %s205 = scalar_lea.vmem %s2, %s204
      %v206 = vld [vmem:[%s182] sm:$0xff]
      %v207 = vld [vmem:[%s182 + $0x8] sm:$0xff]
      %v208 = vld [vmem:[%s182 + $0x10] sm:$0xff]
      %v209 = vld [vmem:[%s182 + $0x18] sm:$0xff]
      %v210 = vld [vmem:[%s182 + $0x20] sm:$0xff]
      %v211 = vld [vmem:[%s182 + $0x28] sm:$0xff]
      %v212 = vld [vmem:[%s196] sm:$0xff]
      %v213 = vld [vmem:[%s196 + $0x8] sm:$0xff]
      %v214 = vld [vmem:[%s196 + $0x10] sm:$0xff]
      %v215 = vld [vmem:[%s196 + $0x18] sm:$0xff]
      %v216 = vld [vmem:[%s196 + $0x20] sm:$0xff]
      %v217 = vld [vmem:[%s196 + $0x28] sm:$0xff]
      %v218 = vcvt.f32.s32.to.zero.pseudo %v212
      %v219 = vcvt.f32.s32.to.zero.pseudo %v213
      %v220 = vcvt.f32.s32.to.zero.pseudo %v214
      %v221 = vcvt.f32.s32.to.zero.pseudo %v215
      %v222 = vcvt.f32.s32.to.zero.pseudo %v216
      %v223 = vcvt.f32.s32.to.zero.pseudo %v217
      %v224 = vlaneseq
      %v225 = vand.u32 %v224, 127
      %226 = vset.pattern.permute.xlu0 0
      %227 = vperm.xlu0 %226, %v218
      %v228 = vpop.permute.xlu0 %227
      %229 = vset.pattern.permute.xlu0 0
      %230 = vperm.xlu0 %229, %v219
      %v231 = vpop.permute.xlu0 %230
      %232 = vset.pattern.permute.xlu0 0
      %233 = vperm.xlu0 %232, %v220
      %v234 = vpop.permute.xlu0 %233
      %235 = vset.pattern.permute.xlu0 0
      %236 = vperm.xlu0 %235, %v221
      %v237 = vpop.permute.xlu0 %236
      %238 = vset.pattern.permute.xlu0 0
      %239 = vperm.xlu0 %238, %v222
      %v240 = vpop.permute.xlu0 %239
      %241 = vset.pattern.permute.xlu0 0
      %242 = vperm.xlu0 %241, %v223
      %v243 = vpop.permute.xlu0 %242
      %vm244 = vcmp.eq.s32.totalorder %v225, %v228
      %vm245 = vcmp.eq.s32.totalorder %v225, %v231
      %vm246 = vcmp.eq.s32.totalorder %v225, %v234
      %vm247 = vcmp.eq.s32.totalorder %v225, %v237
      %vm248 = vcmp.eq.s32.totalorder %v225, %v240
      %vm249 = vcmp.eq.s32.totalorder %v225, %v243
      %250 = vmax.xlane.f32.xlu0 %v206
      %v251 = vpop.xlane.xlu0 %250
      %252 = vmax.xlane.f32.xlu0 %v207
      %v253 = vpop.xlane.xlu0 %252
      %254 = vmax.xlane.f32.xlu0 %v208
      %v255 = vpop.xlane.xlu0 %254
      %256 = vmax.xlane.f32.xlu0 %v209
      %v257 = vpop.xlane.xlu0 %256
      %258 = vmax.xlane.f32.xlu0 %v210
      %v259 = vpop.xlane.xlu0 %258
      %260 = vmax.xlane.f32.xlu0 %v211
      %v261 = vpop.xlane.xlu0 %260
      %v262 = vsub.f32 %v206, %v251
      %v263 = vsub.f32 %v207, %v253
      %v264 = vsub.f32 %v208, %v255
      %v265 = vsub.f32 %v209, %v257
      %v266 = vsub.f32 %v210, %v259
      %v267 = vsub.f32 %v211, %v261
      %v268 = vmul.f32 %v262, 1.442695
      %v269 = vpow.pop %v268
      %v270 = vmul.f32 %v263, 1.442695
      %v271 = vpow.pop %v270
      %v272 = vmul.f32 %v264, 1.442695
      %v273 = vpow.pop %v272
      %v274 = vmul.f32 %v265, 1.442695
      %v275 = vpow.pop %v274
      %v276 = vmul.f32 %v266, 1.442695
      %v277 = vpow.pop %v276
      %v278 = vmul.f32 %v267, 1.442695
      %v279 = vpow.pop %v278
      %280 = vadd.xlane.f32.xlu0 %v269
      %v281 = vpop.xlane.xlu0 %280
      %282 = vadd.xlane.f32.xlu0 %v271
      %v283 = vpop.xlane.xlu0 %282
      %284 = vadd.xlane.f32.xlu0 %v273
      %v285 = vpop.xlane.xlu0 %284
      %286 = vadd.xlane.f32.xlu0 %v275
      %v287 = vpop.xlane.xlu0 %286
      %288 = vadd.xlane.f32.xlu0 %v277
      %v289 = vpop.xlane.xlu0 %288
      %290 = vadd.xlane.f32.xlu0 %v279
      %v291 = vpop.xlane.xlu0 %290
      %v292 = vlog2.pop %v281
      %v293 = vmul.f32 %v292, 0.6931472
      %v294 = vlog2.pop %v283
      %v295 = vmul.f32 %v294, 0.6931472
      %v296 = vlog2.pop %v285
      %v297 = vmul.f32 %v296, 0.6931472
      %v298 = vlog2.pop %v287
      %v299 = vmul.f32 %v298, 0.6931472
      %v300 = vlog2.pop %v289
      %v301 = vmul.f32 %v300, 0.6931472
      %v302 = vlog2.pop %v291
      %v303 = vmul.f32 %v302, 0.6931472
      %v304 = vadd.f32 %v251, %v293
      %v305 = vadd.f32 %v253, %v295
      %v306 = vadd.f32 %v255, %v297
      %v307 = vadd.f32 %v257, %v299
      %v308 = vadd.f32 %v259, %v301
      %v309 = vadd.f32 %v261, %v303
      %v310 = vsel %vm244, %v206, 0.0
      %v311 = vsel %vm245, %v207, 0.0
      %v312 = vsel %vm246, %v208, 0.0
      %v313 = vsel %vm247, %v209, 0.0
      %v314 = vsel %vm248, %v210, 0.0
      %v315 = vsel %vm249, %v211, 0.0
      %316 = vadd.xlane.f32.xlu0 %v310
      %v317 = vpop.xlane.xlu0 %316
      %318 = vadd.xlane.f32.xlu0 %v311
      %v319 = vpop.xlane.xlu0 %318
      %320 = vadd.xlane.f32.xlu0 %v312
      %v321 = vpop.xlane.xlu0 %320
      %322 = vadd.xlane.f32.xlu0 %v313
      %v323 = vpop.xlane.xlu0 %322
      %324 = vadd.xlane.f32.xlu0 %v314
      %v325 = vpop.xlane.xlu0 %324
      %326 = vadd.xlane.f32.xlu0 %v315
      %v327 = vpop.xlane.xlu0 %326
      %v328 = vsub.f32 %v304, %v317
      %v329 = vsub.f32 %v305, %v319
      %v330 = vsub.f32 %v306, %v321
      %v331 = vsub.f32 %v307, %v323
      %v332 = vsub.f32 %v308, %v325
      %v333 = vsub.f32 %v309, %v327
      %v334 = vlaneseq
      %v335 = vshrl.u32 %v334, 7
      %v336 = vadd.s32 %v335, 8
      %v337 = vadd.s32 %v335, 16
      %v338 = vadd.s32 %v335, 24
      %v339 = vadd.s32 %v335, 32
      %v340 = vadd.s32 %v335, 40
      %s341 = smul.u32 %s13, 48
      %v342 = vstv %s341
      %v343 = vadd.s32 %v342, %v335
      %v344 = vadd.s32 %v342, %v336
      %v345 = vadd.s32 %v342, %v337
      %v346 = vadd.s32 %v342, %v338
      %v347 = vadd.s32 %v342, %v339
      %v348 = vadd.s32 %v342, %v340
      %vm349 = vcmp.lt.s32.totalorder %v343, 70
      %vm350 = vcmp.lt.s32.totalorder %v344, 70
      %vm351 = vcmp.lt.s32.totalorder %v345, 70
      %vm352 = vcmp.lt.s32.totalorder %v346, 70
      %vm353 = vcmp.lt.s32.totalorder %v347, 70
      %vm354 = vcmp.lt.s32.totalorder %v348, 70
      %v355 = vmul.f32 %v328, %v212
      %v356 = vmul.f32 %v329, %v213
      %v357 = vmul.f32 %v330, %v214
      %v358 = vmul.f32 %v331, %v215
      %v359 = vmul.f32 %v332, %v216
      %v360 = vmul.f32 %v333, %v217
      %v361 = vsel %vm349, %v355, 0.0
      %v362 = vsel %vm350, %v356, 0.0
      %v363 = vsel %vm351, %v357, 0.0
      %v364 = vsel %vm352, %v358, 0.0
      %v365 = vsel %vm353, %v359, 0.0
      %v366 = vsel %vm354, %v360, 0.0
      %373 = vrot.lane.b32.xlu0 %v361, 127
      %v374 = vpop.permute.xlu0 %373
      %375 = vrot.lane.b32.xlu0 %v362, 127
      %v376 = vpop.permute.xlu0 %375
      %377 = vrot.lane.b32.xlu0 %v363, 127
      %v378 = vpop.permute.xlu0 %377
      %379 = vrot.lane.b32.xlu0 %v364, 127
      %v380 = vpop.permute.xlu0 %379
      %381 = vrot.lane.b32.xlu0 %v365, 127
      %v382 = vpop.permute.xlu0 %381
      %383 = vrot.lane.b32.xlu0 %v366, 127
      %v384 = vpop.permute.xlu0 %383
      %vm391 = vcmask 7168
      %v392 = vsel %vm391, %v374, 0.0
      %v393 = vsel %vm391, %v376, 0.0
      %v394 = vadd.f32 %v392, %v393
      %v395 = vsel %vm391, %v378, 0.0
      %v396 = vadd.f32 %v394, %v395
      %v397 = vsel %vm391, %v380, 0.0
      %v398 = vadd.f32 %v396, %v397
      %v399 = vsel %vm391, %v382, 0.0
      %v400 = vadd.f32 %v398, %v399
      %v401 = vsel %vm391, %v384, 0.0
      %v402 = vadd.f32 %v400, %v401
      %403 = vadd.xlane.f32.xlu0 %v402
      %v404 = vpop.xlane.xlu0 %403
      %v405 = vrot.slane %v404, 4
      %v406 = vadd.f32 %v404, %v405
      %v407 = vrot.slane %v406, 2
      %v408 = vadd.f32 %v406, %v407
      %v409 = vrot.slane %v408, 1
      %v410 = vadd.f32 %v408, %v409
      %s411 = vtos %v410
      %v412 = vstv %s411
      %413 = vst [vmem:[%s205] sm:$0xff] %v412
      %p414 = scmp.lt.s32.totalorder %s13, 1
      %s415 = scalar_select %p414, %s13, 1
      %s416 = smul.addr %s415, 8
      %s417 = scalar_lea.vmem %s2, %s416
      // Predicated region
      $region29: #{weighted_ce_loss.1} parent=27 // pred_check
        %p418 = pneg %p83
      $region30: #{weighted_ce_loss.1} parent=27 // pred_check_branch
        %420 = sbr.rel (%p418) target = $region32
      $region31: #{weighted_ce_loss.1} parent=27 // pred_region
        _
      $region32: #{weighted_ce_loss.1} parent=27 // pred_fallthru
        _
    $region28: #{weighted_ce_loss.1} parent=5 // pred_fallthru
      _
    %p421 = scmp.le.s32.totalorder 2, %s8
    // Predicated region
    $region33: #{weighted_ce_loss.1} parent=5 // pred_check
      %p422 = pneg %p421
    $region34: #{weighted_ce_loss.1} parent=5 // pred_check_branch
      %424 = sbr.rel (%p422) target = $region36
    $region35: #{weighted_ce_loss.1} parent=5 // pred_region
      %s425 = ssub.s32 %s8, 2
      // Predicated region
      $region37: #{weighted_ce_loss.1} parent=35 // pred_check
        %p426 = pneg %p89
      $region38: #{weighted_ce_loss.1} parent=35 // pred_check_branch
        %428 = sbr.rel (%p426) target = $region40
      $region39: #{weighted_ce_loss.1} parent=35 // pred_region
        %p429 = scmp.lt.s32.totalorder %s14, 1
        %s430 = scalar_select %p429, %s14, 1
        %s431 = smul.addr %s430, 8
        %s432 = scalar_lea.vmem %s2, %s431
      $region40: #{weighted_ce_loss.1} parent=35 // pred_fallthru
        _
    $region36: #{weighted_ce_loss.1} parent=5 // pred_fallthru
      _
  $region6: #{weighted_ce_loss.1} parent=0 // loop_footer
    %s12 = sadd.s32 1, %s8
  $region7: #{weighted_ce_loss.1} parent=0 // loop_footer_branch
    %7 = sbr.rel target = $region3
  $region8: #{weighted_ce_loss.1} parent=0 // loop_exit
    _

</llo_original>
